<compile_context>
chip_gen: v7x
topology: tpu7x:2x2x1
jax: 0.10.0
libtpu: 0.0.40
codegen_flags: <defaults>
</compile_context>

<pallas_src>
import functools

import jax
import jax.numpy as jnp
from jax.experimental import pallas as pl
from jax.experimental.pallas import tpu as pltpu

# ----------------------------- model hyper-params -----------------------------
NUM_FEATURES = 50          # vocab size
EMBED_DIM    = 32          # embedding_dim
CHANNELS     = [16, 8]     # channel_list
NUM_CLASSES  = 4
KSIZE        = 3           # Conv1d kernel_size
BATCH        = 2
SEQ_LEN      = 8           # length: 8 -> 6 -> 4 after the two valid convs
LANES        = 128         # lane-dense output padding


# ------------------------------ in-kernel helpers ------------------------------
def _im2col(x2d, batch, l_in, ksize):
    """x2d: (batch*l_in, C) -> (batch*l_out, ksize*C) of valid conv windows.

    All slices/concats are static (trace-time Python loops), stay 2-D, and keep
    the channel axis on lanes.
    """
    l_out = l_in - (ksize - 1)
    per_batch = []
    for b in range(batch):
        xb = x2d[b * l_in:(b + 1) * l_in, :]                      # (l_in, C)
        win = jnp.concatenate([xb[t:t + l_out, :] for t in range(ksize)],
                              axis=-1)                            # (l_out, K*C)
        per_batch.append(win)
    return per_batch[0] if batch == 1 else jnp.concatenate(per_batch, axis=0)


# --------------------------------- kernel -------------------------------------
def surname_cnn_kernel(tok_ref, emb_ref, w1_ref, b1_ref, w2_ref, b2_ref,
                       pool_ref, wfc_ref, bfc_ref, out_ref, *,
                       batch, seq_len, ksize):
    """Single invocation processes the whole batch.

    tok_ref  : (B*L, 1)      int32 token ids
    emb_ref  : (V, E)        bf16 embedding table
    w1_ref   : (K*E, C1)     bf16 fused conv1 weight (im2col layout)
    b1_ref   : (1, C1)       f32
    w2_ref   : (K*C1, C2)    bf16 fused conv2 weight
    b2_ref   : (1, C2)       f32
    pool_ref : (B, B*L2)     bf16 block-diagonal mean-pooling matrix (1/L2)
    wfc_ref  : (C2, 128)     bf16 FC weight, zero-padded to 128 lanes
    bfc_ref  : (1, 128)      f32 FC bias, zero-padded
    out_ref  : (B, 128)      f32 lane-dense logits (first NC columns valid)
    """
    vocab, embed_dim = emb_ref.shape
    c1 = b1_ref.shape[1]
    bl = batch * seq_len
    l1 = seq_len - (ksize - 1)
    l2 = l1 - (ksize - 1)
    bf16 = emb_ref.dtype

    # --- embedding lookup as one-hot @ table (keeps the gather on the MXU) ----
    tok = tok_ref[...]                                            # (B*L, 1) i32
    col = jax.lax.broadcasted_iota(jnp.int32, (bl, vocab), 1)
    onehot = jnp.where(col == tok, 1.0, 0.0).astype(bf16)         # (B*L, V)
    x = jnp.dot(onehot, emb_ref[...],
                preferred_element_type=jnp.float32)               # (B*L, E) f32
    x = x.astype(bf16)

    # --- Conv1d #1 (k=3, valid) + ReLU: im2col -> one matmul ------------------
    win1 = _im2col(x, batch, seq_len, ksize)                      # (B*L1, K*E)
    h1 = jnp.dot(win1, w1_ref[...],
                 preferred_element_type=jnp.float32)              # (B*L1, C1)
    h1 = jnp.maximum(h1 + b1_ref[...], 0.0)                       # f32 elementwise
    h1 = h1.astype(bf16)

    # --- Conv1d #2 + ReLU ------------------------------------------------------
    win2 = _im2col(h1, batch, l1, ksize)                          # (B*L2, K*C1)
    h2 = jnp.dot(win2, w2_ref[...],
                 preferred_element_type=jnp.float32)              # (B*L2, C2)
    h2 = jnp.maximum(h2 + b2_ref[...], 0.0)                       # f32 elementwise

    # --- mean over length folded into the MXU chain ---------------------------
    pooled = jnp.dot(pool_ref[...], h2.astype(bf16),
                     preferred_element_type=jnp.float32)          # (B, C2) f32

    # --- FC head, lane-padded to 128 (one unmasked store) ---------------------
    logits = jnp.dot(pooled.astype(bf16), wfc_ref[...],
                     preferred_element_type=jnp.float32) + bfc_ref[...]
    out_ref[...] = logits                                         # (B, 128) f32


# --------------------------------- wrapper ------------------------------------
@jax.jit
def surname_cnn_forward(tokens, emb_table, w1, b1, w2, b2, wfc, bfc):
    B, L = tokens.shape
    V, E = emb_table.shape
    C1 = w1.shape[2]
    C2 = w2.shape[2]
    NC = wfc.shape[1]
    L1 = L - (KSIZE - 1)
    L2 = L1 - (KSIZE - 1)

    # Layout plumbing outside the kernel (free glue):
    tok2d = tokens.reshape(B * L, 1).astype(jnp.int32)
    emb_bf = emb_table.astype(jnp.bfloat16)
    w1f = w1.reshape(KSIZE * E, C1).astype(jnp.bfloat16)          # im2col layout
    w2f = w2.reshape(KSIZE * C1, C2).astype(jnp.bfloat16)
    b1f = b1.reshape(1, C1).astype(jnp.float32)
    b2f = b2.reshape(1, C2).astype(jnp.float32)
    # Block-diagonal mean-pooling matrix: pooled = pool @ h2  (MXU, not XLU).
    pool = jnp.kron(jnp.eye(B, dtype=jnp.float32),
                    jnp.full((1, L2), 1.0 / L2, jnp.float32)).astype(jnp.bfloat16)
    # Lane-dense FC: pad N to 128 so the output store is unmasked.
    wfc_pad = jnp.zeros((C2, LANES), jnp.bfloat16).at[:, :NC].set(
        wfc.astype(jnp.bfloat16))
    bfc_pad = jnp.zeros((1, LANES), jnp.float32).at[:, :NC].set(
        bfc.reshape(1, NC).astype(jnp.float32))

    kernel = functools.partial(surname_cnn_kernel,
                               batch=B, seq_len=L, ksize=KSIZE)
    vmem = pl.BlockSpec(memory_space=pltpu.MemorySpace.VMEM)

    # Single grid step: whole batch in one invocation (no per-step overhead).
    # TODO(synk): for large B, tile the batch (grid over batch chunks sized so
    # the stacked matmul M dim is a multiple of 8, ideally >=128).
    out = pl.pallas_call(
        kernel,
        out_shape=jax.ShapeDtypeStruct((B, LANES), jnp.float32),
        in_specs=[vmem] * 9,
        out_specs=vmem,
    )(tok2d, emb_bf, w1f, b1f, w2f, b2f, pool, wfc_pad, bfc_pad)

    logits = out[:, :NC]                 # (B, NC)
    return jnp.squeeze(logits)           # mirrors torch .squeeze()


# --------------------------- pure-JAX f32 reference ----------------------------
def surname_cnn_reference(tokens, emb_table, w1, b1, w2, b2, wfc, bfc):
    emb = jnp.take(emb_table, tokens.astype(jnp.int32), axis=0).astype(jnp.float32)

    def conv1d(x, w, b):  # x: (B, L, Cin), w: (K, Cin, Cout), b: (1, Cout)
        L_out = x.shape[1] - (KSIZE - 1)
        acc = jnp.zeros((x.shape[0], L_out, w.shape[2]), jnp.float32)
        for k in range(KSIZE):
            acc = acc + jnp.einsum('blc,cd->bld', x[:, k:k + L_out, :], w[k])
        return jnp.maximum(acc + b[None, :, :], 0.0)

    h = conv1d(emb, w1, b1)
    h = conv1d(h, w2, b2)
    pooled = jnp.mean(h, axis=1)                      # (B, C2)
    logits = pooled @ wfc + bfc                       # (B, NC)
    return jnp.squeeze(logits)


# ----------------------------------- main --------------------------------------
if __name__ == "__main__":
    key = jax.random.PRNGKey(0)
    k_tok, k_emb, k_w1, k_b1, k_w2, k_b2, k_wfc, k_bfc = jax.random.split(key, 8)

    tokens = jax.random.randint(k_tok, (BATCH, SEQ_LEN), 0, NUM_FEATURES,
                                dtype=jnp.int32)
    emb_table = jax.random.normal(k_emb, (NUM_FEATURES, EMBED_DIM),
                                  dtype=jnp.float32)          # nn.Embedding ~ N(0,1)

    def conv_init(kw, kb, cin, cout):
        bound = 1.0 / jnp.sqrt(cin * KSIZE)
        w = jax.random.uniform(kw, (KSIZE, cin, cout), jnp.float32, -bound, bound)
        b = jax.random.uniform(kb, (1, cout), jnp.float32, -bound, bound)
        return w, b

    w1, b1 = conv_init(k_w1, k_b1, EMBED_DIM, CHANNELS[0])
    w2, b2 = conv_init(k_w2, k_b2, CHANNELS[0], CHANNELS[1])

    fc_bound = 1.0 / jnp.sqrt(CHANNELS[1])
    wfc = jax.random.uniform(k_wfc, (CHANNELS[1], NUM_CLASSES), jnp.float32,
                             -fc_bound, fc_bound)
    bfc = jax.random.uniform(k_bfc, (1, NUM_CLASSES), jnp.float32,
                             -fc_bound, fc_bound)

    logits = surname_cnn_forward(tokens, emb_table, w1, b1, w2, b2, wfc, bfc)
    logits = jax.block_until_ready(logits)

    ref = surname_cnn_reference(tokens, emb_table, w1, b1, w2, b2, wfc, bfc)
    assert logits.shape == ref.shape == (BATCH, NUM_CLASSES)
    # bf16 MXU operands (f32 accumulation) -> loosened tolerance vs f32 reference.
    assert jnp.allclose(logits, ref, atol=2e-2, rtol=2e-2), "mismatch vs reference"

    print("KERNEL_OK")
</pallas_src>

<mosaic_0001>
module attributes {stable_mosaic.version = 11 : i64} {
  func.func @surname_cnn_kernel(%arg0: memref<16x1xi32, #tpu.memory_space<vmem>>, %arg1: memref<50x32xbf16, #tpu.memory_space<vmem>>, %arg2: memref<96x16xbf16, #tpu.memory_space<vmem>>, %arg3: memref<1x16xf32, #tpu.memory_space<vmem>>, %arg4: memref<48x8xbf16, #tpu.memory_space<vmem>>, %arg5: memref<1x8xf32, #tpu.memory_space<vmem>>, %arg6: memref<2x8xbf16, #tpu.memory_space<vmem>>, %arg7: memref<8x128xbf16, #tpu.memory_space<vmem>>, %arg8: memref<1x128xf32, #tpu.memory_space<vmem>>, %arg9: memref<2x128xf32, #tpu.memory_space<vmem>>) attributes {dimension_semantics = [], scalar_prefetch = 0 : i64, scratch_operands = 0 : i64, tpu.core_type = #tpu.core_type<tc>} {
    %c0 = arith.constant 0 : index
    %c0_0 = arith.constant 0 : index
    %0 = vector.load %arg0[%c0, %c0_0] : memref<16x1xi32, #tpu.memory_space<vmem>>, vector<16x1xi32>
    %1 = tpu.iota {dimensions = array<i32: 1>} : vector<16x50xi32>
    %2 = vector.broadcast %0 : vector<16x1xi32> to vector<16x50xi32>
    %3 = arith.cmpi eq, %1, %2 : vector<16x50xi32>
    %cst = arith.constant 1.000000e+00 : f32
    %cst_1 = arith.constant 0.000000e+00 : f32
    %4 = vector.broadcast %cst : f32 to vector<16x50xf32>
    %5 = vector.broadcast %cst_1 : f32 to vector<16x50xf32>
    %6 = arith.select %3, %4, %5 : vector<16x50xi1>, vector<16x50xf32>
    %7 = arith.truncf %6 : vector<16x50xf32> to vector<16x50xbf16>
    %c0_2 = arith.constant 0 : index
    %c0_3 = arith.constant 0 : index
    %8 = vector.load %arg1[%c0_2, %c0_3] : memref<50x32xbf16, #tpu.memory_space<vmem>>, vector<50x32xbf16>
    %cst_4 = arith.constant dense<0.000000e+00> : vector<16x32xf32>
    %9 = tpu.matmul %7, %8, %cst_4 {dimension_numbers = #tpu.dot_dimension_numbers<[1], [0], [0], [1], [0, 0, 1, 1], [], []>} : vector<16x50xbf16>, vector<50x32xbf16>, vector<16x32xf32> -> vector<16x32xf32>
    %10 = arith.truncf %9 : vector<16x32xf32> to vector<16x32xbf16>
    %11 = vector.extract_strided_slice %10 {offsets = [0, 0], sizes = [8, 32], strides = [1, 1]} : vector<16x32xbf16> to vector<8x32xbf16>
    %12 = vector.extract_strided_slice %11 {offsets = [0, 0], sizes = [6, 32], strides = [1, 1]} : vector<8x32xbf16> to vector<6x32xbf16>
    %13 = vector.extract_strided_slice %11 {offsets = [1, 0], sizes = [6, 32], strides = [1, 1]} : vector<8x32xbf16> to vector<6x32xbf16>
    %14 = vector.extract_strided_slice %11 {offsets = [2, 0], sizes = [6, 32], strides = [1, 1]} : vector<8x32xbf16> to vector<6x32xbf16>
    %15 = tpu.concatenate %12, %13, %14 in 1 : vector<6x32xbf16>, vector<6x32xbf16>, vector<6x32xbf16> -> vector<6x96xbf16>
    %16 = vector.extract_strided_slice %10 {offsets = [8, 0], sizes = [8, 32], strides = [1, 1]} : vector<16x32xbf16> to vector<8x32xbf16>
    %17 = vector.extract_strided_slice %16 {offsets = [0, 0], sizes = [6, 32], strides = [1, 1]} : vector<8x32xbf16> to vector<6x32xbf16>
    %18 = vector.extract_strided_slice %16 {offsets = [1, 0], sizes = [6, 32], strides = [1, 1]} : vector<8x32xbf16> to vector<6x32xbf16>
    %19 = vector.extract_strided_slice %16 {offsets = [2, 0], sizes = [6, 32], strides = [1, 1]} : vector<8x32xbf16> to vector<6x32xbf16>
    %20 = tpu.concatenate %17, %18, %19 in 1 : vector<6x32xbf16>, vector<6x32xbf16>, vector<6x32xbf16> -> vector<6x96xbf16>
    %21 = tpu.concatenate %15, %20 in 0 : vector<6x96xbf16>, vector<6x96xbf16> -> vector<12x96xbf16>
    %c0_5 = arith.constant 0 : index
    %c0_6 = arith.constant 0 : index
    %22 = vector.load %arg2[%c0_5, %c0_6] : memref<96x16xbf16, #tpu.memory_space<vmem>>, vector<96x16xbf16>
    %cst_7 = arith.constant dense<0.000000e+00> : vector<12x16xf32>
    %23 = tpu.matmul %21, %22, %cst_7 {dimension_numbers = #tpu.dot_dimension_numbers<[1], [0], [0], [1], [0, 0, 1, 1], [], []>} : vector<12x96xbf16>, vector<96x16xbf16>, vector<12x16xf32> -> vector<12x16xf32>
    %c0_8 = arith.constant 0 : index
    %c0_9 = arith.constant 0 : index
    %24 = vector.load %arg3[%c0_8, %c0_9] : memref<1x16xf32, #tpu.memory_space<vmem>>, vector<1x16xf32>
    %25 = vector.broadcast %24 : vector<1x16xf32> to vector<12x16xf32>
    %26 = arith.addf %23, %25 : vector<12x16xf32>
    %cst_10 = arith.constant 0.000000e+00 : f32
    %27 = vector.broadcast %cst_10 : f32 to vector<12x16xf32>
    %28 = arith.maximumf %26, %27 : vector<12x16xf32>
    %29 = arith.truncf %28 : vector<12x16xf32> to vector<12x16xbf16>
    %30 = vector.extract_strided_slice %29 {offsets = [0, 0], sizes = [6, 16], strides = [1, 1]} : vector<12x16xbf16> to vector<6x16xbf16>
    %31 = vector.extract_strided_slice %30 {offsets = [0, 0], sizes = [4, 16], strides = [1, 1]} : vector<6x16xbf16> to vector<4x16xbf16>
    %32 = vector.extract_strided_slice %30 {offsets = [1, 0], sizes = [4, 16], strides = [1, 1]} : vector<6x16xbf16> to vector<4x16xbf16>
    %33 = vector.extract_strided_slice %30 {offsets = [2, 0], sizes = [4, 16], strides = [1, 1]} : vector<6x16xbf16> to vector<4x16xbf16>
    %34 = tpu.concatenate %31, %32, %33 in 1 : vector<4x16xbf16>, vector<4x16xbf16>, vector<4x16xbf16> -> vector<4x48xbf16>
    %35 = vector.extract_strided_slice %29 {offsets = [6, 0], sizes = [6, 16], strides = [1, 1]} : vector<12x16xbf16> to vector<6x16xbf16>
    %36 = vector.extract_strided_slice %35 {offsets = [0, 0], sizes = [4, 16], strides = [1, 1]} : vector<6x16xbf16> to vector<4x16xbf16>
    %37 = vector.extract_strided_slice %35 {offsets = [1, 0], sizes = [4, 16], strides = [1, 1]} : vector<6x16xbf16> to vector<4x16xbf16>
    %38 = vector.extract_strided_slice %35 {offsets = [2, 0], sizes = [4, 16], strides = [1, 1]} : vector<6x16xbf16> to vector<4x16xbf16>
    %39 = tpu.concatenate %36, %37, %38 in 1 : vector<4x16xbf16>, vector<4x16xbf16>, vector<4x16xbf16> -> vector<4x48xbf16>
    %40 = tpu.concatenate %34, %39 in 0 : vector<4x48xbf16>, vector<4x48xbf16> -> vector<8x48xbf16>
    %c0_11 = arith.constant 0 : index
    %c0_12 = arith.constant 0 : index
    %41 = vector.load %arg4[%c0_11, %c0_12] : memref<48x8xbf16, #tpu.memory_space<vmem>>, vector<48x8xbf16>
    %cst_13 = arith.constant dense<0.000000e+00> : vector<8x8xf32>
    %42 = tpu.matmul %40, %41, %cst_13 {dimension_numbers = #tpu.dot_dimension_numbers<[1], [0], [0], [1], [0, 0, 1, 1], [], []>} : vector<8x48xbf16>, vector<48x8xbf16>, vector<8x8xf32> -> vector<8x8xf32>
    %c0_14 = arith.constant 0 : index
    %c0_15 = arith.constant 0 : index
    %43 = vector.load %arg5[%c0_14, %c0_15] : memref<1x8xf32, #tpu.memory_space<vmem>>, vector<1x8xf32>
    %44 = vector.broadcast %43 : vector<1x8xf32> to vector<8x8xf32>
    %45 = arith.addf %42, %44 : vector<8x8xf32>
    %cst_16 = arith.constant 0.000000e+00 : f32
    %46 = vector.broadcast %cst_16 : f32 to vector<8x8xf32>
    %47 = arith.maximumf %45, %46 : vector<8x8xf32>
    %c0_17 = arith.constant 0 : index
    %c0_18 = arith.constant 0 : index
    %48 = vector.load %arg6[%c0_17, %c0_18] : memref<2x8xbf16, #tpu.memory_space<vmem>>, vector<2x8xbf16>
    %49 = arith.truncf %47 : vector<8x8xf32> to vector<8x8xbf16>
    %cst_19 = arith.constant dense<0.000000e+00> : vector<2x8xf32>
    %50 = tpu.matmul %48, %49, %cst_19 {dimension_numbers = #tpu.dot_dimension_numbers<[1], [0], [0], [1], [0, 0, 1, 1], [], []>} : vector<2x8xbf16>, vector<8x8xbf16>, vector<2x8xf32> -> vector<2x8xf32>
    %51 = arith.truncf %50 : vector<2x8xf32> to vector<2x8xbf16>
    %c0_20 = arith.constant 0 : index
    %c0_21 = arith.constant 0 : index
    %52 = vector.load %arg7[%c0_20, %c0_21] : memref<8x128xbf16, #tpu.memory_space<vmem>>, vector<8x128xbf16>
    %cst_22 = arith.constant dense<0.000000e+00> : vector<2x128xf32>
    %53 = tpu.matmul %51, %52, %cst_22 {dimension_numbers = #tpu.dot_dimension_numbers<[1], [0], [0], [1], [0, 0, 1, 1], [], []>} : vector<2x8xbf16>, vector<8x128xbf16>, vector<2x128xf32> -> vector<2x128xf32>
    %c0_23 = arith.constant 0 : index
    %c0_24 = arith.constant 0 : index
    %54 = vector.load %arg8[%c0_23, %c0_24] : memref<1x128xf32, #tpu.memory_space<vmem>>, vector<1x128xf32>
    %55 = vector.broadcast %54 : vector<1x128xf32> to vector<2x128xf32>
    %56 = arith.addf %53, %55 : vector<2x128xf32>
    %c0_25 = arith.constant 0 : index
    %c0_26 = arith.constant 0 : index
    %57 = vector.load %arg9[%c0_25, %c0_26] : memref<2x128xf32, #tpu.memory_space<vmem>>, vector<2x128xf32>
    tpu.vector_store %arg9[%c0_25, %c0_26], %56 {strides = array<i32>} : memref<2x128xf32, #tpu.memory_space<vmem>>, vector<2x128xf32>,
    return
  }
}

</mosaic_0001>

<llo_original>
// kernel: surname_cnn_forward.1
$region0: #{surname_cnn_forward.1}
  #allocation0 [shape = 'u32[]', space=smem, size = 0x4, offset = 0x4, fixed_abs, tag = 'smem constant byte address 0x4 - core index']
  #allocation1 [shape = 'u32[144,128]{1,0:T(1,128)}', space=vmem, size = 0x12000, scoped, tag = 'internal scratch']
  %s0 = inlined_call_operand.vmem [shape: s32[16,1], index: 0, kind: input, shape index: {}]
  %s1 = inlined_call_operand.vmem [shape: bf16[50,32], index: 1, kind: input, shape index: {}]
  %s2 = inlined_call_operand.vmem [shape: bf16[96,16], index: 2, kind: input, shape index: {}]
  %s3 = inlined_call_operand.vmem [shape: f32[1,16], index: 3, kind: input, shape index: {}]
  %s4 = inlined_call_operand.vmem [shape: bf16[48,8], index: 4, kind: input, shape index: {}]
  %s5 = inlined_call_operand.vmem [shape: f32[1,8], index: 5, kind: input, shape index: {}]
  %s6 = inlined_call_operand.vmem [shape: bf16[2,8], index: 6, kind: input, shape index: {}]
  %s7 = inlined_call_operand.vmem [shape: bf16[8,128], index: 7, kind: input, shape index: {}]
  %s8 = inlined_call_operand.vmem [shape: f32[1,128], index: 8, kind: input, shape index: {}]
  %s9 = inlined_call_operand.hbm [shape: f32[2,128], index: 9, kind: output, shape index: {}]
  %s10 = sld [smem:[#allocation0]]
  $region46: #{surname_cnn_forward.1} parent=0
    _
  %s12 = ssub.s32 1, %s10
  %s13 = scalar_select 0, %s12, %s10
  $region1: #{surname_cnn_forward.1} parent=0
    #allocation2 [shape = 'u8[1024]{0}', space=vmem, size = 0x400, scoped, tag = 'output window, operand 0, single buffered']
    #allocation3 [shape = 's32[1]{0}', space=sflag, size = 0x4, scoped, tag = 'scoped memory for surname_cnn_forward.1']
    %14 = vsyncpa [#allocation3], 0
    // Predicated region
    $region2: #{surname_cnn_forward.1} parent=1 // pred_check
      _
    $region3: #{surname_cnn_forward.1} parent=1 // pred_check_branch
      %16 = sbr.rel (0) target = $region5
    $region4: #{surname_cnn_forward.1} parent=1 // pred_region
      _
    $region5: #{surname_cnn_forward.1} parent=1 // pred_fallthru
      _
    // Predicated region
    $region6: #{surname_cnn_forward.1} parent=1 // pred_check
      _
    $region7: #{surname_cnn_forward.1} parent=1 // pred_check_branch
      %18 = sbr.rel (0) target = $region9
    $region8: #{surname_cnn_forward.1} parent=1 // pred_region
      _
    $region9: #{surname_cnn_forward.1} parent=1 // pred_fallthru
      _
    // Predicated region
    $region10: #{surname_cnn_forward.1} parent=1 // pred_check
      _
    $region11: #{surname_cnn_forward.1} parent=1 // pred_check_branch
      %20 = sbr.rel (0) target = $region13
    $region12: #{surname_cnn_forward.1} parent=1 // pred_region
      _
    $region13: #{surname_cnn_forward.1} parent=1 // pred_fallthru
      _
    // Predicated region
    $region14: #{surname_cnn_forward.1} parent=1 // pred_check
      _
    $region15: #{surname_cnn_forward.1} parent=1 // pred_check_branch
      %22 = sbr.rel (0) target = $region17
    $region16: #{surname_cnn_forward.1} parent=1 // pred_region
      _
    $region17: #{surname_cnn_forward.1} parent=1 // pred_fallthru
      _
    // Predicated region
    $region18: #{surname_cnn_forward.1} parent=1 // pred_check
      _
    $region19: #{surname_cnn_forward.1} parent=1 // pred_check_branch
      %24 = sbr.rel (0) target = $region21
    $region20: #{surname_cnn_forward.1} parent=1 // pred_region
      _
    $region21: #{surname_cnn_forward.1} parent=1 // pred_fallthru
      _
    // Predicated region
    $region22: #{surname_cnn_forward.1} parent=1 // pred_check
      _
    $region23: #{surname_cnn_forward.1} parent=1 // pred_check_branch
      %26 = sbr.rel (0) target = $region25
    $region24: #{surname_cnn_forward.1} parent=1 // pred_region
      _
    $region25: #{surname_cnn_forward.1} parent=1 // pred_fallthru
      _
    // Predicated region
    $region26: #{surname_cnn_forward.1} parent=1 // pred_check
      _
    $region27: #{surname_cnn_forward.1} parent=1 // pred_check_branch
      %28 = sbr.rel (0) target = $region29
    $region28: #{surname_cnn_forward.1} parent=1 // pred_region
      _
    $region29: #{surname_cnn_forward.1} parent=1 // pred_fallthru
      _
    // Predicated region
    $region30: #{surname_cnn_forward.1} parent=1 // pred_check
      _
    $region31: #{surname_cnn_forward.1} parent=1 // pred_check_branch
      %30 = sbr.rel (0) target = $region33
    $region32: #{surname_cnn_forward.1} parent=1 // pred_region
      _
    $region33: #{surname_cnn_forward.1} parent=1 // pred_fallthru
      _
    // Predicated region
    $region34: #{surname_cnn_forward.1} parent=1 // pred_check
      _
    $region35: #{surname_cnn_forward.1} parent=1 // pred_check_branch
      %32 = sbr.rel (0) target = $region37
    $region36: #{surname_cnn_forward.1} parent=1 // pred_region
      _
    $region37: #{surname_cnn_forward.1} parent=1 // pred_fallthru
      _
    %v34 = vld [vmem:[%s0] sm:$0xff]
    %v35 = vld [vmem:[%s0 + $0x8] sm:$0xff]
    %v36 = vlaneseq
    %v37 = vand.u32 %v36, 127
    %38 = vset.pattern.permute.xlu0 0
    %39 = vperm.xlu0 %38, %v34
    %v40 = vpop.permute.xlu0 %39
    %41 = vset.pattern.permute.xlu0 0
    %42 = vperm.xlu0 %41, %v35
    %v43 = vpop.permute.xlu0 %42
    %vm44 = vcmp.eq.s32.totalorder %v37, %v40
    %vm45 = vcmp.eq.s32.totalorder %v37, %v43
    %v46 = vsel %vm44, 1.0, 0.0
    %v47 = vsel %vm45, 1.0, 0.0
    %v48 = vpack.c.bf16 %v47, %v46
    %v49 = vld [vmem:[%s1] sm:$0xf]
    %v50 = vld [vmem:[%s1 + $0x4] sm:$0xf]
    %v51 = vld [vmem:[%s1 + $0x8] sm:$0xf]
    %v52 = vld [vmem:[%s1 + $0xc] sm:$0xf]
    %v53 = vld [vmem:[%s1 + $0x10] sm:$0xf]
    %v54 = vld [vmem:[%s1 + $0x14] sm:$0xf]
    %v55 = vld [vmem:[%s1 + $0x18] sm:$0x1]
    %v63 = vunpack.c.l.b16 %v49
    %v64 = vunpack.c.l.b16 %v50
    %v65 = vunpack.c.l.b16 %v51
    %v66 = vunpack.c.l.b16 %v52
    %v67 = vunpack.c.l.b16 %v53
    %v68 = vunpack.c.l.b16 %v54
    %v69 = vunpack.c.l.b16 %v55
    %v70 = vpack.c.b16 %v64, %v63
    %v71 = vpack.c.b16 %v66, %v65
    %v72 = vpack.c.b16 %v68, %v67
    %v73 = vpack.c.b16 %v69, %v69
    %vm77 = vcmask 408576
    %v79 = vsel %vm77, %v48, 0
    %vm81 = vcmask 1040384
    %v83 = vsel %vm81, %v73, 0
    %85 = vmatprep.subr.bf16.mxu0 0
    %86 = vmatpush1.bf16.msra.mxu0 %v70
    %87 = vmatprep.subr.bf16.mxu0 0
    %88 = vmatpush1.bf16.msra.mxu0 %v71
    %89 = vmatprep.subr.bf16.mxu0 0
    %90 = vmatpush1.bf16.msra.mxu0 %v72
    %91 = vmatprep.subr.bf16.mxu0 0
    %92 = vmatpush1.bf16.msra.mxu0 %v83
    %93 = vmatprep.subr.bf16.mxu0 0
    %94 = vmatpush1.bf16.msra.mxu0 0
    %95 = vmatprep.subr.bf16.mxu0 0
    %96 = vmatpush1.bf16.msra.mxu0 0
    %97 = vmatprep.subr.bf16.mxu0 0
    %98 = vmatpush1.bf16.msra.mxu0 0
    %99 = vmatprep.subr.bf16.mxu0 0
    %100 = vmatpush1.bf16.msra.mxu0 0
    %101 = vmatprep.subr.bf16.mxu0 0
    %102 = vmatpush1.bf16.msra.mxu0 0
    %103 = vmatprep.subr.bf16.mxu0 0
    %104 = vmatpush1.bf16.msra.mxu0 0
    %105 = vmatprep.subr.bf16.mxu0 0
    %106 = vmatpush1.bf16.msra.mxu0 0
    %107 = vmatprep.subr.bf16.mxu0 0
    %108 = vmatpush1.bf16.msra.mxu0 0
    %109 = vmatprep.subr.bf16.mxu0 0
    %110 = vmatpush1.bf16.msra.mxu0 0
    %111 = vmatprep.subr.bf16.mxu0 0
    %112 = vmatpush1.bf16.msra.mxu0 0
    %113 = vmatprep.subr.bf16.mxu0 0
    %114 = vmatpush1.bf16.msra.mxu0 0
    %115 = vmatprep.subr.bf16.mxu0 0
    %116 = vmatpush1.bf16.msra.mxu0 0
    %117 = vmatprep.mubr.bf16.mxu0 0
    %118 = vmatmul.mubr.bf16.gmra.mrb[0].mxu0 %v79
    %v119 = vpop.f32.mrb[0].mxu0
    %v120 = vadd.f32 0.0, %v119
    %v121 = vpop.f32.mrb[0].mxu0
    %v122 = vpop.f32.mrb[0].mxu0
    %v123 = vadd.f32 0.0, %v122
    %v124 = vpop.f32.mrb[0].mxu0
    %125 = vdwg.mxu0
    %v126 = vpack.c.bf16 %v123, %v120
    %v128 = vshrl.u32 %v126, 16
    %v130 = vshll.u32 %v126, 16
    %v132 = vrot.slane %v130, 1
    %v133 = vor.u32 %v128, %v132
    %134 = vrot.lane.b32.xlu0 %v133, 32
    %v135 = vpop.permute.xlu0 %134
    %v137 = vrot.slane %v126, 1
    %138 = vrot.lane.b32.xlu0 %v137, 64
    %v139 = vpop.permute.xlu0 %138
    %vm140 = vcmask 261120
    %v142 = vsel %vm140, %v126, %v135
    %vm143 = vcmask 523264
    %v145 = vsel %vm143, %v142, %v139
    %v147 = vrot.slane %v145, 1
    %vm148 = vcmask 1042432
    %v150 = vsel %vm148, %v145, %v147
    %v151 = vld [vmem:[%s2] sm:$0xf]
    %v152 = vld [vmem:[%s2 + $0x4] sm:$0xf]
    %v153 = vld [vmem:[%s2 + $0x8] sm:$0xf]
    %v154 = vld [vmem:[%s2 + $0xc] sm:$0xf]
    %v155 = vld [vmem:[%s2 + $0x10] sm:$0xf]
    %v156 = vld [vmem:[%s2 + $0x14] sm:$0xf]
    %v157 = vld [vmem:[%s2 + $0x18] sm:$0xf]
    %v158 = vld [vmem:[%s2 + $0x1c] sm:$0xf]
    %v159 = vld [vmem:[%s2 + $0x20] sm:$0xf]
    %v160 = vld [vmem:[%s2 + $0x24] sm:$0xf]
    %v161 = vld [vmem:[%s2 + $0x28] sm:$0xf]
    %v162 = vld [vmem:[%s2 + $0x2c] sm:$0xf]
    %v163 = vld [vmem:[%s3] sm:$0x1]
    %v165 = vlaneseq
    %v166 = vshrl.u32 %v165, 7
    %v167 = vsub.s32 0, %v166
    %v168 = vrot.slane %v163, %v167
    %v182 = vunpack.c.l.b16 %v151
    %v183 = vunpack.c.l.b16 %v152
    %v184 = vunpack.c.l.b16 %v153
    %v185 = vunpack.c.l.b16 %v154
    %v186 = vunpack.c.l.b16 %v155
    %v187 = vunpack.c.l.b16 %v156
    %v188 = vunpack.c.l.b16 %v157
    %v189 = vunpack.c.l.b16 %v158
    %v190 = vunpack.c.l.b16 %v159
    %v191 = vunpack.c.l.b16 %v160
    %v192 = vunpack.c.l.b16 %v161
    %v193 = vunpack.c.l.b16 %v162
    %v194 = vpack.c.b16 %v183, %v182
    %v195 = vpack.c.b16 %v185, %v184
    %v196 = vpack.c.b16 %v187, %v186
    %v197 = vpack.c.b16 %v189, %v188
    %v198 = vpack.c.b16 %v191, %v190
    %v199 = vpack.c.b16 %v193, %v192
    %vm206 = vcmask 785408
    %v207 = vsel %vm206, %v150, 0
    %209 = vmatprep.subr.bf16.mxu0 0
    %210 = vmatpush1.bf16.msra.mxu0 %v194
    %211 = vmatprep.subr.bf16.mxu0 0
    %212 = vmatpush1.bf16.msra.mxu0 %v195
    %213 = vmatprep.subr.bf16.mxu0 0
    %214 = vmatpush1.bf16.msra.mxu0 %v196
    %215 = vmatprep.subr.bf16.mxu0 0
    %216 = vmatpush1.bf16.msra.mxu0 %v197
    %217 = vmatprep.subr.bf16.mxu0 0
    %218 = vmatpush1.bf16.msra.mxu0 %v198
    %219 = vmatprep.subr.bf16.mxu0 0
    %220 = vmatpush1.bf16.msra.mxu0 %v199
    %221 = vmatprep.subr.bf16.mxu0 0
    %222 = vmatpush1.bf16.msra.mxu0 0
    %223 = vmatprep.subr.bf16.mxu0 0
    %224 = vmatpush1.bf16.msra.mxu0 0
    %225 = vmatprep.subr.bf16.mxu0 0
    %226 = vmatpush1.bf16.msra.mxu0 0
    %227 = vmatprep.subr.bf16.mxu0 0
    %228 = vmatpush1.bf16.msra.mxu0 0
    %229 = vmatprep.subr.bf16.mxu0 0
    %230 = vmatpush1.bf16.msra.mxu0 0
    %231 = vmatprep.subr.bf16.mxu0 0
    %232 = vmatpush1.bf16.msra.mxu0 0
    %233 = vmatprep.subr.bf16.mxu0 0
    %234 = vmatpush1.bf16.msra.mxu0 0
    %235 = vmatprep.subr.bf16.mxu0 0
    %236 = vmatpush1.bf16.msra.mxu0 0
    %237 = vmatprep.subr.bf16.mxu0 0
    %238 = vmatpush1.bf16.msra.mxu0 0
    %239 = vmatprep.subr.bf16.mxu0 0
    %240 = vmatpush1.bf16.msra.mxu0 0
    %241 = vmatprep.mubr.bf16.mxu0 0
    %242 = vmatmul.mubr.bf16.gmra.mrb[0].mxu0 %v207
    %v243 = vpop.f32.mrb[0].mxu0
    %v244 = vadd.f32 %v168, %v243
    %v245 = vpop.f32.mrb[0].mxu0
    %v246 = vpop.f32.mrb[0].mxu0
    %v247 = vadd.f32 %v168, %v246
    %v248 = vpop.f32.mrb[0].mxu0
    %249 = vdwg.mxu0
    %v250 = vmax.f32 %v244, 0.0
    %v251 = vmax.f32 %v247, 0.0
    %v252 = vpack.c.bf16 %v251, %v250
    %v254 = vshrl.u32 %v252, 16
    %v256 = vshll.u32 %v252, 16
    %v258 = vrot.slane %v256, 1
    %v259 = vor.u32 %v254, %v258
    %260 = vrot.lane.b32.xlu0 %v259, 16
    %v261 = vpop.permute.xlu0 %260
    %v263 = vrot.slane %v252, 1
    %264 = vrot.lane.b32.xlu0 %v263, 32
    %v265 = vpop.permute.xlu0 %264
    %vm266 = vcmask 130048
    %v268 = vsel %vm266, %v252, %v261
    %v270 = vsel %vm140, %v268, %v265
    %v272 = vrot.slane %v270, 1
    %vm273 = vcmask 1041408
    %v275 = vsel %vm273, %v270, %v272
    %v276 = vld [vmem:[%s4] sm:$0xf]
    %v277 = vld [vmem:[%s4 + $0x4] sm:$0xf]
    %v278 = vld [vmem:[%s4 + $0x8] sm:$0xf]
    %v279 = vld [vmem:[%s4 + $0xc] sm:$0xf]
    %v280 = vld [vmem:[%s4 + $0x10] sm:$0xf]
    %v281 = vld [vmem:[%s4 + $0x14] sm:$0xf]
    %v282 = vld [vmem:[%s5] sm:$0x1]
    %v284 = vlaneseq
    %v285 = vshrl.u32 %v284, 7
    %v286 = vsub.s32 0, %v285
    %v287 = vrot.slane %v282, %v286
    %v295 = vunpack.c.l.b16 %v276
    %v296 = vunpack.c.l.b16 %v277
    %v297 = vunpack.c.l.b16 %v278
    %v298 = vunpack.c.l.b16 %v279
    %v299 = vunpack.c.l.b16 %v280
    %v300 = vunpack.c.l.b16 %v281
    %v301 = vpack.c.b16 %v296, %v295
    %v302 = vpack.c.b16 %v298, %v297
    %v303 = vpack.c.b16 %v300, %v299
    %vm307 = vcmask 392192
    %v308 = vsel %vm307, %v275, 0
    %310 = vmatprep.subr.bf16.mxu0 0
    %311 = vmatpush1.bf16.msra.mxu0 %v301
    %312 = vmatprep.subr.bf16.mxu0 0
    %313 = vmatpush1.bf16.msra.mxu0 %v302
    %314 = vmatprep.subr.bf16.mxu0 0
    %315 = vmatpush1.bf16.msra.mxu0 %v303
    %316 = vmatprep.subr.bf16.mxu0 0
    %317 = vmatpush1.bf16.msra.mxu0 0
    %318 = vmatprep.subr.bf16.mxu0 0
    %319 = vmatpush1.bf16.msra.mxu0 0
    %320 = vmatprep.subr.bf16.mxu0 0
    %321 = vmatpush1.bf16.msra.mxu0 0
    %322 = vmatprep.subr.bf16.mxu0 0
    %323 = vmatpush1.bf16.msra.mxu0 0
    %324 = vmatprep.subr.bf16.mxu0 0
    %325 = vmatpush1.bf16.msra.mxu0 0
    %326 = vmatprep.subr.bf16.mxu0 0
    %327 = vmatpush1.bf16.msra.mxu0 0
    %328 = vmatprep.subr.bf16.mxu0 0
    %329 = vmatpush1.bf16.msra.mxu0 0
    %330 = vmatprep.subr.bf16.mxu0 0
    %331 = vmatpush1.bf16.msra.mxu0 0
    %332 = vmatprep.subr.bf16.mxu0 0
    %333 = vmatpush1.bf16.msra.mxu0 0
    %334 = vmatprep.subr.bf16.mxu0 0
    %335 = vmatpush1.bf16.msra.mxu0 0
    %336 = vmatprep.subr.bf16.mxu0 0
    %337 = vmatpush1.bf16.msra.mxu0 0
    %338 = vmatprep.subr.bf16.mxu0 0
    %339 = vmatpush1.bf16.msra.mxu0 0
    %340 = vmatprep.subr.bf16.mxu0 0
    %341 = vmatpush1.bf16.msra.mxu0 0
    %342 = vmatprep.mubr.bf16.mxu0 0
    %343 = vmatmul.mubr.bf16.gmra.mrb[0].mxu0 %v308
    %v344 = vpop.f32.mrb[0].mxu0
    %v345 = vadd.f32 %v287, %v344
    %v346 = vpop.f32.mrb[0].mxu0
    %v347 = vpop.f32.mrb[0].mxu0
    %v348 = vpop.f32.mrb[0].mxu0
    %349 = vdwg.mxu0
    %v350 = vmax.f32 %v345, 0.0
    %v351 = vld [vmem:[%s6] sm:$0x1]
    %v352 = vpack.c.bf16 %v350, %v350
    %vm353 = vcmask 64512
    %v355 = vsel %vm353, %v351, 0
    %vm357 = vcmask 1043456
    %v359 = vsel %vm357, %v352, 0
    %361 = vmatprep.subr.bf16.mxu0 0
    %362 = vmatpush1.bf16.msra.mxu0 %v359
    %363 = vmatprep.subr.bf16.mxu0 0
    %364 = vmatpush1.bf16.msra.mxu0 0
    %365 = vmatprep.subr.bf16.mxu0 0
    %366 = vmatpush1.bf16.msra.mxu0 0
    %367 = vmatprep.subr.bf16.mxu0 0
    %368 = vmatpush1.bf16.msra.mxu0 0
    %369 = vmatprep.subr.bf16.mxu0 0
    %370 = vmatpush1.bf16.msra.mxu0 0
    %371 = vmatprep.subr.bf16.mxu0 0
    %372 = vmatpush1.bf16.msra.mxu0 0
    %373 = vmatprep.subr.bf16.mxu0 0
    %374 = vmatpush1.bf16.msra.mxu0 0
    %375 = vmatprep.subr.bf16.mxu0 0
    %376 = vmatpush1.bf16.msra.mxu0 0
    %377 = vmatprep.subr.bf16.mxu0 0
    %378 = vmatpush1.bf16.msra.mxu0 0
    %379 = vmatprep.subr.bf16.mxu0 0
    %380 = vmatpush1.bf16.msra.mxu0 0
    %381 = vmatprep.subr.bf16.mxu0 0
    %382 = vmatpush1.bf16.msra.mxu0 0
    %383 = vmatprep.subr.bf16.mxu0 0
    %384 = vmatpush1.bf16.msra.mxu0 0
    %385 = vmatprep.subr.bf16.mxu0 0
    %386 = vmatpush1.bf16.msra.mxu0 0
    %387 = vmatprep.subr.bf16.mxu0 0
    %388 = vmatpush1.bf16.msra.mxu0 0
    %389 = vmatprep.subr.bf16.mxu0 0
    %390 = vmatpush1.bf16.msra.mxu0 0
    %391 = vmatprep.subr.bf16.mxu0 0
    %392 = vmatpush1.bf16.msra.mxu0 0
    %393 = vmatprep.mubr.bf16.mxu0 0
    %394 = vmatmul.mubr.bf16.gmra.mrb[0].mxu0 %v355
    %v395 = vpop.f32.mrb[0].mxu0
    %v396 = vadd.f32 0.0, %v395
    %v397 = vpop.f32.mrb[0].mxu0
    %v398 = vpop.f32.mrb[0].mxu0
    %v399 = vpop.f32.mrb[0].mxu0
    %400 = vdwg.mxu0
    %v401 = vpack.c.bf16 %v396, %v396
    %v402 = vld [vmem:[%s7] sm:$0xf]
    %v403 = vld [vmem:[%s8] sm:$0x1]
    %v405 = vlaneseq
    %v406 = vshrl.u32 %v405, 7
    %v407 = vsub.s32 0, %v406
    %v408 = vrot.slane %v403, %v407
    %v411 = vsel %vm353, %v401, 0
    %v414 = vsel %vm357, %v402, 0
    %416 = vmatprep.subr.bf16.mxu0 0
    %417 = vmatpush1.bf16.msra.mxu0 %v414
    %418 = vmatprep.subr.bf16.mxu0 0
    %419 = vmatpush1.bf16.msra.mxu0 0
    %420 = vmatprep.subr.bf16.mxu0 0
    %421 = vmatpush1.bf16.msra.mxu0 0
    %422 = vmatprep.subr.bf16.mxu0 0
    %423 = vmatpush1.bf16.msra.mxu0 0
    %424 = vmatprep.subr.bf16.mxu0 0
    %425 = vmatpush1.bf16.msra.mxu0 0
    %426 = vmatprep.subr.bf16.mxu0 0
    %427 = vmatpush1.bf16.msra.mxu0 0
    %428 = vmatprep.subr.bf16.mxu0 0
    %429 = vmatpush1.bf16.msra.mxu0 0
    %430 = vmatprep.subr.bf16.mxu0 0
    %431 = vmatpush1.bf16.msra.mxu0 0
    %432 = vmatprep.subr.bf16.mxu0 0
    %433 = vmatpush1.bf16.msra.mxu0 0
    %434 = vmatprep.subr.bf16.mxu0 0
    %435 = vmatpush1.bf16.msra.mxu0 0
    %436 = vmatprep.subr.bf16.mxu0 0
    %437 = vmatpush1.bf16.msra.mxu0 0
    %438 = vmatprep.subr.bf16.mxu0 0
    %439 = vmatpush1.bf16.msra.mxu0 0
    %440 = vmatprep.subr.bf16.mxu0 0
    %441 = vmatpush1.bf16.msra.mxu0 0
    %442 = vmatprep.subr.bf16.mxu0 0
    %443 = vmatpush1.bf16.msra.mxu0 0
    %444 = vmatprep.subr.bf16.mxu0 0
    %445 = vmatpush1.bf16.msra.mxu0 0
    %446 = vmatprep.subr.bf16.mxu0 0
    %447 = vmatpush1.bf16.msra.mxu0 0
    %448 = vmatprep.mubr.bf16.mxu0 0
    %449 = vmatmul.mubr.bf16.gmra.mrb[0].mxu0 %v411
    %v450 = vpop.f32.mrb[0].mxu0
    %v451 = vadd.f32 %v408, %v450
    %v452 = vpop.f32.mrb[0].mxu0
    %v453 = vpop.f32.mrb[0].mxu0
    %v454 = vpop.f32.mrb[0].mxu0
    %455 = vdwg.mxu0
    %456 = vst [vmem:[#allocation2] sm:$0x3] %v451
    // Predicated region
    $region38: #{surname_cnn_forward.1} parent=1 // pred_check
      _
    $region39: #{surname_cnn_forward.1} parent=1 // pred_check_branch
      %458 = sbr.rel (0) target = $region41
    $region40: #{surname_cnn_forward.1} parent=1 // pred_region
      %s460 = ssub.s32 32, 32
      %461 = vsyncadd [#allocation3], %s460
      %s463 = sshll.u32 [#allocation2], 4
      %s464 = int_to_ptr.vmem [resolvable:$true] %s463
      %466 = dma.vmem_to_hbm [thread:$0]  %s464, 32, %s9, [#allocation3]
    $region41: #{surname_cnn_forward.1} parent=1 // pred_fallthru
      _
    // Predicated region
    $region42: #{surname_cnn_forward.1} parent=1 // pred_check
      _
    $region43: #{surname_cnn_forward.1} parent=1 // pred_check_branch
      %468 = sbr.rel (0) target = $region45
    $region44: #{surname_cnn_forward.1} parent=1 // pred_region
      %469 = dma.done [#allocation3], 32
    $region45: #{surname_cnn_forward.1} parent=1 // pred_fallthru
      _
    %470 = vsyncpa [#allocation3], 1

</llo_original>
